<compile_context>
chip_gen: v6e
topology: v6e:2x2x1
jax: 0.10.0
libtpu: 0.0.40
codegen_flags: <defaults>
</compile_context>

<pallas_src>
import jax
import jax.numpy as jnp
from jax.experimental import pallas as pl
from jax.experimental.pallas import tpu as pltpu  # noqa: F401  (TPU backend)

K_CHEB = 3  # ChebConv constructed with K=2  ->  K+1 = 3 polynomial terms


def _res_cheb_gc_kernel(x_ref, lblk_ref, w1_ref, b1_ref, tproj_ref,
                        w2_ref, b2_ref, out_ref):
    x = x_ref[...]                    # [B*N, Cin]   (batch folded into sublanes)
    lb = lblk_ref[...]                # [B*N, B*N]   block-diagonal L over batch

    # ---- gconv1: ChebConv(input_dim -> hid_dim) + ReLU --------------------
    lx = jnp.dot(lb, x, preferred_element_type=jnp.float32)       # L x
    l2x = jnp.dot(lb, lx, preferred_element_type=jnp.float32)     # L^2 x
    z1 = jnp.concatenate([x, lx, l2x], axis=-1)                   # [B*N, 3*Cin]
    h = jnp.dot(z1, w1_ref[...], preferred_element_type=jnp.float32) + b1_ref[...]
    h = jnp.maximum(h, 0.0)           # ReLU (dropout = identity at inference)

    # ---- temb branch (projection precomputed in wrapper) -------------------
    h = h + tproj_ref[...]            # [B*N, Chid]

    # ---- gconv2: ChebConv(hid_dim -> output_dim) + ReLU --------------------
    lh = jnp.dot(lb, h, preferred_element_type=jnp.float32)
    l2h = jnp.dot(lb, lh, preferred_element_type=jnp.float32)
    z2 = jnp.concatenate([h, lh, l2h], axis=-1)                   # [B*N, 3*Chid]
    o = jnp.dot(z2, w2_ref[...], preferred_element_type=jnp.float32) + b2_ref[...]
    o = jnp.maximum(o, 0.0)

    # ---- residual (requires Cin == Cout) -----------------------------------
    out_ref[...] = x + o


def cheb_polynomials(adj):
    """T0 = I, T1 = L, T2 = 2*L@L - I   (used by the pure-JAX reference only)."""
    N = adj.shape[0]
    T0 = jnp.eye(N, dtype=jnp.float32)
    T1 = adj.astype(jnp.float32)
    T2 = 2.0 * jnp.dot(T1, T1) - T0
    return jnp.stack([T0, T1, T2], axis=0)         # [3, N, N]


def res_cheb_gc_diff(x, temb, adj, params):
    w1, b1, wt, bt, w2, b2 = params
    B, N, Cin = x.shape
    Chid = w1.shape[2]
    Cout = w2.shape[2]
    assert Cin == Cout, "residual add requires input_dim == output_dim"

    L = adj.astype(jnp.float32)
    # Block-diagonal L over the batch -> the whole batch runs as one matmul.
    # (For large N, switch to per-batch L matmuls / node tiling instead of the
    #  B^2 N^2 block-diagonal to stay within VMEM.)
    L_blk = jnp.kron(jnp.eye(B, dtype=jnp.float32), L)            # [B*N, B*N]

    # Fold the Chebyshev recurrence (T0=I, T2=2L^2-I) into the weights:
    #   sum_k T_k x W_k = x (W0 - W2) + (L x) W1 + (L^2 x) (2 W2)
    w1f = jnp.concatenate([w1[0] - w1[2], w1[1], 2.0 * w1[2]], axis=0)   # [3*Cin, Chid]
    w2f = jnp.concatenate([w2[0] - w2[2], w2[1], 2.0 * w2[2]], axis=0)   # [3*Chid, Cout]

    # temb branch hoisted out of the kernel: one batched XLA matmul.
    t = temb * jax.nn.sigmoid(temb)                               # swish
    tproj = t @ wt + bt                                           # [B, Chid]
    tproj_full = jnp.broadcast_to(tproj[:, None, :], (B, N, Chid)).reshape(B * N, Chid)

    x_flat = x.reshape(B * N, Cin)

    out_flat = pl.pallas_call(
        _res_cheb_gc_kernel,
        out_shape=jax.ShapeDtypeStruct((B * N, Cout), jnp.float32),
    )(x_flat, L_blk, w1f, b1, tproj_full, w2f, b2)

    return out_flat.reshape(B, N, Cout)


def reference(x, temb, adj, params):
    """Pure-JAX reference of the PyTorch forward (eval mode), un-folded form."""
    w1, b1, wt, bt, w2, b2 = params
    T = cheb_polynomials(adj)

    def cheb_relu(xin, w, b):
        out = sum(jnp.einsum('nm,bmc->bnc', T[k], xin) @ w[k] for k in range(K_CHEB))
        return jnp.maximum(out + b, 0.0)

    h = cheb_relu(x, w1, b1)
    t = temb * jax.nn.sigmoid(temb)
    h = h + (t @ wt + bt)[:, None, :]
    o = cheb_relu(h, w2, b2)
    return x + o


if __name__ == "__main__":
    # small shapes consistent with the module: B=2 batch, N=16 graph nodes,
    # input_dim = output_dim = 32 (residual requires equality), hid_dim = 64,
    # emd_dim = 32.
    B, N, Cin, Chid, Cout, E = 2, 16, 32, 64, 32, 32

    key = jax.random.PRNGKey(0)
    ks = jax.random.split(key, 8)
    x = jax.random.normal(ks[0], (B, N, Cin), jnp.float32)
    temb = jax.random.normal(ks[1], (B, E), jnp.float32)
    a = jax.random.uniform(ks[2], (N, N), jnp.float32)
    adj = (a + a.T) / (2.0 * N)                    # symmetric, roughly normalized

    def xavier(k, shape, fan_in, fan_out):         # xavier_normal_ analogue
        std = (2.0 / (fan_in + fan_out)) ** 0.5
        return std * jax.random.normal(k, shape, jnp.float32)

    w1 = xavier(ks[3], (K_CHEB, Cin, Chid), Cin, Chid)    # ChebConv1 weight [K+1, in, out]
    b1 = jnp.zeros((1, Chid), jnp.float32)                # ChebConv1 bias (zero-init)
    wt = xavier(ks[4], (E, Chid), E, Chid)                # temb_proj weight (transposed)
    bt = 0.1 * jax.random.normal(ks[5], (1, Chid), jnp.float32)
    w2 = xavier(ks[6], (K_CHEB, Chid, Cout), Chid, Cout)  # ChebConv2 weight
    b2 = jnp.zeros((1, Cout), jnp.float32)
    params = (w1, b1, wt, bt, w2, b2)

    out = res_cheb_gc_diff(x, temb, adj, params)
    out = jax.block_until_ready(out)

    ref = reference(x, temb, adj, params)
    assert out.shape == (B, N, Cout)
    assert jnp.allclose(out, ref, atol=1e-4, rtol=1e-4), "mismatch vs JAX reference"

    # TODO(synk): dropout inside _GraphConv is omitted (identity in eval mode).
    print("KERNEL_OK")
</pallas_src>

<mosaic_0001>
module attributes {stable_mosaic.version = 11 : i64} {
  func.func @_res_cheb_gc_kernel(%arg0: memref<32x32xf32, #tpu.memory_space<vmem>>, %arg1: memref<32x32xf32, #tpu.memory_space<vmem>>, %arg2: memref<96x64xf32, #tpu.memory_space<vmem>>, %arg3: memref<1x64xf32, #tpu.memory_space<vmem>>, %arg4: memref<32x64xf32, #tpu.memory_space<vmem>>, %arg5: memref<192x32xf32, #tpu.memory_space<vmem>>, %arg6: memref<1x32xf32, #tpu.memory_space<vmem>>, %arg7: memref<32x32xf32, #tpu.memory_space<vmem>>) attributes {dimension_semantics = [], scalar_prefetch = 0 : i64, scratch_operands = 0 : i64, tpu.core_type = #tpu.core_type<tc>} {
    %c0 = arith.constant 0 : index
    %c0_0 = arith.constant 0 : index
    %0 = vector.load %arg0[%c0, %c0_0] : memref<32x32xf32, #tpu.memory_space<vmem>>, vector<32x32xf32>
    %c0_1 = arith.constant 0 : index
    %c0_2 = arith.constant 0 : index
    %1 = vector.load %arg1[%c0_1, %c0_2] : memref<32x32xf32, #tpu.memory_space<vmem>>, vector<32x32xf32>
    %cst = arith.constant dense<0.000000e+00> : vector<32x32xf32>
    %2 = tpu.matmul %1, %0, %cst {dimension_numbers = #tpu.dot_dimension_numbers<[1], [0], [0], [1], [0, 0, 1, 1], [], []>} : vector<32x32xf32>, vector<32x32xf32>, vector<32x32xf32> -> vector<32x32xf32>
    %cst_3 = arith.constant dense<0.000000e+00> : vector<32x32xf32>
    %3 = tpu.matmul %1, %2, %cst_3 {dimension_numbers = #tpu.dot_dimension_numbers<[1], [0], [0], [1], [0, 0, 1, 1], [], []>} : vector<32x32xf32>, vector<32x32xf32>, vector<32x32xf32> -> vector<32x32xf32>
    %4 = tpu.concatenate %0, %2, %3 in 1 : vector<32x32xf32>, vector<32x32xf32>, vector<32x32xf32> -> vector<32x96xf32>
    %c0_4 = arith.constant 0 : index
    %c0_5 = arith.constant 0 : index
    %5 = vector.load %arg2[%c0_4, %c0_5] : memref<96x64xf32, #tpu.memory_space<vmem>>, vector<96x64xf32>
    %cst_6 = arith.constant dense<0.000000e+00> : vector<32x64xf32>
    %6 = tpu.matmul %4, %5, %cst_6 {dimension_numbers = #tpu.dot_dimension_numbers<[1], [0], [0], [1], [0, 0, 1, 1], [], []>} : vector<32x96xf32>, vector<96x64xf32>, vector<32x64xf32> -> vector<32x64xf32>
    %c0_7 = arith.constant 0 : index
    %c0_8 = arith.constant 0 : index
    %7 = vector.load %arg3[%c0_7, %c0_8] : memref<1x64xf32, #tpu.memory_space<vmem>>, vector<1x64xf32>
    %8 = vector.broadcast %7 : vector<1x64xf32> to vector<32x64xf32>
    %9 = arith.addf %6, %8 : vector<32x64xf32>
    %cst_9 = arith.constant 0.000000e+00 : f32
    %10 = vector.broadcast %cst_9 : f32 to vector<32x64xf32>
    %11 = arith.maximumf %9, %10 : vector<32x64xf32>
    %c0_10 = arith.constant 0 : index
    %c0_11 = arith.constant 0 : index
    %12 = vector.load %arg4[%c0_10, %c0_11] : memref<32x64xf32, #tpu.memory_space<vmem>>, vector<32x64xf32>
    %13 = arith.addf %11, %12 : vector<32x64xf32>
    %cst_12 = arith.constant dense<0.000000e+00> : vector<32x64xf32>
    %14 = tpu.matmul %1, %13, %cst_12 {dimension_numbers = #tpu.dot_dimension_numbers<[1], [0], [0], [1], [0, 0, 1, 1], [], []>} : vector<32x32xf32>, vector<32x64xf32>, vector<32x64xf32> -> vector<32x64xf32>
    %cst_13 = arith.constant dense<0.000000e+00> : vector<32x64xf32>
    %15 = tpu.matmul %1, %14, %cst_13 {dimension_numbers = #tpu.dot_dimension_numbers<[1], [0], [0], [1], [0, 0, 1, 1], [], []>} : vector<32x32xf32>, vector<32x64xf32>, vector<32x64xf32> -> vector<32x64xf32>
    %16 = tpu.concatenate %13, %14, %15 in 1 : vector<32x64xf32>, vector<32x64xf32>, vector<32x64xf32> -> vector<32x192xf32>
    %c0_14 = arith.constant 0 : index
    %c0_15 = arith.constant 0 : index
    %17 = vector.load %arg5[%c0_14, %c0_15] : memref<192x32xf32, #tpu.memory_space<vmem>>, vector<192x32xf32>
    %cst_16 = arith.constant dense<0.000000e+00> : vector<32x32xf32>
    %18 = tpu.matmul %16, %17, %cst_16 {dimension_numbers = #tpu.dot_dimension_numbers<[1], [0], [0], [1], [0, 0, 1, 1], [], []>} : vector<32x192xf32>, vector<192x32xf32>, vector<32x32xf32> -> vector<32x32xf32>
    %c0_17 = arith.constant 0 : index
    %c0_18 = arith.constant 0 : index
    %19 = vector.load %arg6[%c0_17, %c0_18] : memref<1x32xf32, #tpu.memory_space<vmem>>, vector<1x32xf32>
    %20 = vector.broadcast %19 : vector<1x32xf32> to vector<32x32xf32>
    %21 = arith.addf %18, %20 : vector<32x32xf32>
    %cst_19 = arith.constant 0.000000e+00 : f32
    %22 = vector.broadcast %cst_19 : f32 to vector<32x32xf32>
    %23 = arith.maximumf %21, %22 : vector<32x32xf32>
    %24 = arith.addf %0, %23 : vector<32x32xf32>
    %c0_20 = arith.constant 0 : index
    %c0_21 = arith.constant 0 : index
    %25 = vector.load %arg7[%c0_20, %c0_21] : memref<32x32xf32, #tpu.memory_space<vmem>>, vector<32x32xf32>
    tpu.vector_store %arg7[%c0_20, %c0_21], %24 {strides = array<i32>} : memref<32x32xf32, #tpu.memory_space<vmem>>, vector<32x32xf32>,
    return
  }
}

</mosaic_0001>

<llo_original>
// kernel: tpu_custom_call.1
$region0: #{tpu_custom_call.1}
  #allocation0 [shape = 'u32[]', space=smem, size = 0x4, offset = 0x4, fixed_abs, tag = 'smem constant byte address 0x4 - core index']
  #allocation1 [shape = 'u32[144,128]{1,0:T(1,128)}', space=vmem, size = 0x12000, scoped, tag = 'internal scratch']
  %s0 = inlined_call_operand.vmem [shape: f32[32,32], index: 0, kind: input, shape index: {}]
  %s1 = inlined_call_operand.vmem [shape: f32[32,32], index: 1, kind: input, shape index: {}]
  %s2 = inlined_call_operand.vmem [shape: f32[96,64], index: 2, kind: input, shape index: {}]
  %s3 = inlined_call_operand.vmem [shape: f32[1,64], index: 3, kind: input, shape index: {}]
  %s4 = inlined_call_operand.vmem [shape: f32[32,64], index: 4, kind: input, shape index: {}]
  %s5 = inlined_call_operand.vmem [shape: f32[192,32], index: 5, kind: input, shape index: {}]
  %s6 = inlined_call_operand.vmem [shape: f32[1,32], index: 6, kind: input, shape index: {}]
  %s7 = inlined_call_operand.hbm [shape: f32[32,32], index: 7, kind: output, shape index: {}]
  %s8 = sld [smem:[#allocation0]]
  $region38: #{tpu_custom_call.1} parent=0
    _
  %s10 = ssub.s32 1, %s8
  %s11 = scalar_select 0, %s10, %s8
  $region1: #{tpu_custom_call.1} parent=0
    #allocation2 [shape = 'u8[16384]{0}', space=vmem, size = 0x4000, scoped, tag = 'output window, operand 0, single buffered']
    #allocation3 [shape = 's32[1]{0}', space=sflag, size = 0x4, scoped, tag = 'scoped memory for tpu_custom_call.1']
    %12 = vsyncpa [#allocation3], 0
    // Predicated region
    $region2: #{tpu_custom_call.1} parent=1 // pred_check
      _
    $region3: #{tpu_custom_call.1} parent=1 // pred_check_branch
      %14 = sbr.rel (0) target = $region5
    $region4: #{tpu_custom_call.1} parent=1 // pred_region
      _
    $region5: #{tpu_custom_call.1} parent=1 // pred_fallthru
      _
    // Predicated region
    $region6: #{tpu_custom_call.1} parent=1 // pred_check
      _
    $region7: #{tpu_custom_call.1} parent=1 // pred_check_branch
      %16 = sbr.rel (0) target = $region9
    $region8: #{tpu_custom_call.1} parent=1 // pred_region
      _
    $region9: #{tpu_custom_call.1} parent=1 // pred_fallthru
      _
    // Predicated region
    $region10: #{tpu_custom_call.1} parent=1 // pred_check
      _
    $region11: #{tpu_custom_call.1} parent=1 // pred_check_branch
      %18 = sbr.rel (0) target = $region13
    $region12: #{tpu_custom_call.1} parent=1 // pred_region
      _
    $region13: #{tpu_custom_call.1} parent=1 // pred_fallthru
      _
    // Predicated region
    $region14: #{tpu_custom_call.1} parent=1 // pred_check
      _
    $region15: #{tpu_custom_call.1} parent=1 // pred_check_branch
      %20 = sbr.rel (0) target = $region17
    $region16: #{tpu_custom_call.1} parent=1 // pred_region
      _
    $region17: #{tpu_custom_call.1} parent=1 // pred_fallthru
      _
    // Predicated region
    $region18: #{tpu_custom_call.1} parent=1 // pred_check
      _
    $region19: #{tpu_custom_call.1} parent=1 // pred_check_branch
      %22 = sbr.rel (0) target = $region21
    $region20: #{tpu_custom_call.1} parent=1 // pred_region
      _
    $region21: #{tpu_custom_call.1} parent=1 // pred_fallthru
      _
    // Predicated region
    $region22: #{tpu_custom_call.1} parent=1 // pred_check
      _
    $region23: #{tpu_custom_call.1} parent=1 // pred_check_branch
      %24 = sbr.rel (0) target = $region25
    $region24: #{tpu_custom_call.1} parent=1 // pred_region
      _
    $region25: #{tpu_custom_call.1} parent=1 // pred_fallthru
      _
    // Predicated region
    $region26: #{tpu_custom_call.1} parent=1 // pred_check
      _
    $region27: #{tpu_custom_call.1} parent=1 // pred_check_branch
      %26 = sbr.rel (0) target = $region29
    $region28: #{tpu_custom_call.1} parent=1 // pred_region
      _
    $region29: #{tpu_custom_call.1} parent=1 // pred_fallthru
      _
    %v27 = vld [vmem:[%s0] sm:$0xff]
    %v28 = vld [vmem:[%s0 + $0x8] sm:$0xff]
    %v29 = vld [vmem:[%s0 + $0x10] sm:$0xff]
    %v30 = vld [vmem:[%s0 + $0x18] sm:$0xff]
    %v31 = vld [vmem:[%s1] sm:$0xff]
    %v32 = vld [vmem:[%s1 + $0x8] sm:$0xff]
    %v33 = vld [vmem:[%s1 + $0x10] sm:$0xff]
    %v34 = vld [vmem:[%s1 + $0x18] sm:$0xff]
    %vm35 = vcmask 261120
    %v37 = vsel %vm35, %v31, 0
    %v40 = vsel %vm35, %v32, 0
    %v43 = vsel %vm35, %v33, 0
    %v46 = vsel %vm35, %v34, 0
    %48 = vmatprep.subr.mxu0 0.0
    %49 = vmatpush1.msra.mxu0 0.0
    %50 = vmatprep.subr.mxu0 0.0
    %51 = vmatpush1.msra.mxu0 0.0
    %52 = vmatprep.subr.mxu0 0.0
    %53 = vmatpush1.msra.mxu0 0.0
    %54 = vmatprep.subr.mxu0 0.0
    %55 = vmatpush1.msra.mxu0 0.0
    %56 = vmatprep.subr.mxu0 0.0
    %57 = vmatpush1.msra.mxu0 0.0
    %58 = vmatprep.subr.mxu0 0.0
    %59 = vmatpush1.msra.mxu0 0.0
    %60 = vmatprep.subr.mxu0 0.0
    %61 = vmatpush1.msra.mxu0 0.0
    %62 = vmatprep.subr.mxu0 0.0
    %63 = vmatpush1.msra.mxu0 0.0
    %64 = vmatprep.subr.mxu0 0.0
    %65 = vmatpush1.msra.mxu0 0.0
    %66 = vmatprep.subr.mxu0 0.0
    %67 = vmatpush1.msra.mxu0 0.0
    %68 = vmatprep.subr.mxu0 0.0
    %69 = vmatpush1.msra.mxu0 0.0
    %70 = vmatprep.subr.mxu0 0.0
    %71 = vmatpush1.msra.mxu0 0.0
    %72 = vmatprep.subr.mxu0 0.0
    %73 = vmatpush1.msra.mxu0 %v30
    %74 = vmatprep.subr.mxu0 0.0
    %75 = vmatpush1.msra.mxu0 %v29
    %76 = vmatprep.subr.mxu0 0.0
    %77 = vmatpush1.msra.mxu0 %v28
    %78 = vmatprep.subr.mxu0 0.0
    %79 = vmatpush1.msra.mxu0 %v27
    %80 = vmatprep.subr.mxu0 0.0
    %81 = vmatpush2.msra.mxu0 0.0
    %82 = vmatprep.subr.mxu0 0.0
    %83 = vmatpush2.msra.mxu0 0.0
    %84 = vmatprep.subr.mxu0 0.0
    %85 = vmatpush2.msra.mxu0 0.0
    %86 = vmatprep.subr.mxu0 0.0
    %87 = vmatpush2.msra.mxu0 0.0
    %88 = vmatprep.subr.mxu0 0.0
    %89 = vmatpush2.msra.mxu0 0.0
    %90 = vmatprep.subr.mxu0 0.0
    %91 = vmatpush2.msra.mxu0 0.0
    %92 = vmatprep.subr.mxu0 0.0
    %93 = vmatpush2.msra.mxu0 0.0
    %94 = vmatprep.subr.mxu0 0.0
    %95 = vmatpush2.msra.mxu0 0.0
    %96 = vmatprep.subr.mxu0 0.0
    %97 = vmatpush2.msra.mxu0 0.0
    %98 = vmatprep.subr.mxu0 0.0
    %99 = vmatpush2.msra.mxu0 0.0
    %100 = vmatprep.subr.mxu0 0.0
    %101 = vmatpush2.msra.mxu0 0.0
    %102 = vmatprep.subr.mxu0 0.0
    %103 = vmatpush2.msra.mxu0 0.0
    %104 = vmatprep.subr.mxu0 0.0
    %105 = vmatpush2.msra.mxu0 0.0
    %106 = vmatprep.subr.mxu0 0.0
    %107 = vmatpush2.msra.mxu0 0.0
    %108 = vmatprep.subr.mxu0 0.0
    %109 = vmatpush2.msra.mxu0 0.0
    %110 = vmatprep.subr.mxu0 0.0
    %111 = vmatpush2.msra.mxu0 0.0
    %112 = vmatprep.mubr.f32.mxu0 0.0
    %113 = vmatmul.mubr.f32.gmra.mxu0 %v37
    %v114 = vpop.f32.mrf.mxu0
    %v115 = vadd.f32 0.0, %v114
    %v116 = vpop.f32.mrf.mxu0
    %117 = vmatprep.mubr.f32.mxu0 0.0
    %118 = vmatmul.mubr.f32.gmra.mxu0 %v40
    %v119 = vpop.f32.mrf.mxu0
    %v120 = vadd.f32 0.0, %v119
    %v121 = vpop.f32.mrf.mxu0
    %122 = vmatprep.mubr.f32.mxu0 0.0
    %123 = vmatmul.mubr.f32.gmra.mxu0 %v43
    %v124 = vpop.f32.mrf.mxu0
    %v125 = vadd.f32 0.0, %v124
    %v126 = vpop.f32.mrf.mxu0
    %127 = vmatprep.mubr.f32.mxu0 0.0
    %128 = vmatmul.mubr.f32.gmra.mxu0 %v46
    %v129 = vpop.f32.mrf.mxu0
    %v130 = vadd.f32 0.0, %v129
    %v131 = vpop.f32.mrf.mxu0
    %132 = vdwg.mxu0
    %133 = vmatprep.subr.mxu0 0.0
    %134 = vmatpush1.msra.mxu0 0.0
    %135 = vmatprep.subr.mxu0 0.0
    %136 = vmatpush1.msra.mxu0 0.0
    %137 = vmatprep.subr.mxu0 0.0
    %138 = vmatpush1.msra.mxu0 0.0
    %139 = vmatprep.subr.mxu0 0.0
    %140 = vmatpush1.msra.mxu0 0.0
    %141 = vmatprep.subr.mxu0 0.0
    %142 = vmatpush1.msra.mxu0 0.0
    %143 = vmatprep.subr.mxu0 0.0
    %144 = vmatpush1.msra.mxu0 0.0
    %145 = vmatprep.subr.mxu0 0.0
    %146 = vmatpush1.msra.mxu0 0.0
    %147 = vmatprep.subr.mxu0 0.0
    %148 = vmatpush1.msra.mxu0 0.0
    %149 = vmatprep.subr.mxu0 0.0
    %150 = vmatpush1.msra.mxu0 0.0
    %151 = vmatprep.subr.mxu0 0.0
    %152 = vmatpush1.msra.mxu0 0.0
    %153 = vmatprep.subr.mxu0 0.0
    %154 = vmatpush1.msra.mxu0 0.0
    %155 = vmatprep.subr.mxu0 0.0
    %156 = vmatpush1.msra.mxu0 0.0
    %157 = vmatprep.subr.mxu0 0.0
    %158 = vmatpush1.msra.mxu0 %v130
    %159 = vmatprep.subr.mxu0 0.0
    %160 = vmatpush1.msra.mxu0 %v125
    %161 = vmatprep.subr.mxu0 0.0
    %162 = vmatpush1.msra.mxu0 %v120
    %163 = vmatprep.subr.mxu0 0.0
    %164 = vmatpush1.msra.mxu0 %v115
    %165 = vmatprep.subr.mxu0 0.0
    %166 = vmatpush2.msra.mxu0 0.0
    %167 = vmatprep.subr.mxu0 0.0
    %168 = vmatpush2.msra.mxu0 0.0
    %169 = vmatprep.subr.mxu0 0.0
    %170 = vmatpush2.msra.mxu0 0.0
    %171 = vmatprep.subr.mxu0 0.0
    %172 = vmatpush2.msra.mxu0 0.0
    %173 = vmatprep.subr.mxu0 0.0
    %174 = vmatpush2.msra.mxu0 0.0
    %175 = vmatprep.subr.mxu0 0.0
    %176 = vmatpush2.msra.mxu0 0.0
    %177 = vmatprep.subr.mxu0 0.0
    %178 = vmatpush2.msra.mxu0 0.0
    %179 = vmatprep.subr.mxu0 0.0
    %180 = vmatpush2.msra.mxu0 0.0
    %181 = vmatprep.subr.mxu0 0.0
    %182 = vmatpush2.msra.mxu0 0.0
    %183 = vmatprep.subr.mxu0 0.0
    %184 = vmatpush2.msra.mxu0 0.0
    %185 = vmatprep.subr.mxu0 0.0
    %186 = vmatpush2.msra.mxu0 0.0
    %187 = vmatprep.subr.mxu0 0.0
    %188 = vmatpush2.msra.mxu0 0.0
    %189 = vmatprep.subr.mxu0 0.0
    %190 = vmatpush2.msra.mxu0 0.0
    %191 = vmatprep.subr.mxu0 0.0
    %192 = vmatpush2.msra.mxu0 0.0
    %193 = vmatprep.subr.mxu0 0.0
    %194 = vmatpush2.msra.mxu0 0.0
    %195 = vmatprep.subr.mxu0 0.0
    %196 = vmatpush2.msra.mxu0 0.0
    %197 = vmatprep.mubr.f32.mxu0 0.0
    %198 = vmatmul.mubr.f32.gmra.mxu0 %v37
    %v199 = vpop.f32.mrf.mxu0
    %v200 = vadd.f32 0.0, %v199
    %v201 = vpop.f32.mrf.mxu0
    %202 = vmatprep.mubr.f32.mxu0 0.0
    %203 = vmatmul.mubr.f32.gmra.mxu0 %v40
    %v204 = vpop.f32.mrf.mxu0
    %v205 = vadd.f32 0.0, %v204
    %v206 = vpop.f32.mrf.mxu0
    %207 = vmatprep.mubr.f32.mxu0 0.0
    %208 = vmatmul.mubr.f32.gmra.mxu0 %v43
    %v209 = vpop.f32.mrf.mxu0
    %v210 = vadd.f32 0.0, %v209
    %v211 = vpop.f32.mrf.mxu0
    %212 = vmatprep.mubr.f32.mxu0 0.0
    %213 = vmatmul.mubr.f32.gmra.mxu0 %v46
    %v214 = vpop.f32.mrf.mxu0
    %v215 = vadd.f32 0.0, %v214
    %v216 = vpop.f32.mrf.mxu0
    %217 = vdwg.mxu0
    %222 = vrot.lane.b32.xlu0 %v115, 32
    %v223 = vpop.permute.xlu0 %222
    %224 = vrot.lane.b32.xlu0 %v120, 32
    %v225 = vpop.permute.xlu0 %224
    %226 = vrot.lane.b32.xlu0 %v125, 32
    %v227 = vpop.permute.xlu0 %226
    %228 = vrot.lane.b32.xlu0 %v130, 32
    %v229 = vpop.permute.xlu0 %228
    %238 = vrot.lane.b32.xlu0 %v200, 64
    %v239 = vpop.permute.xlu0 %238
    %240 = vrot.lane.b32.xlu0 %v205, 64
    %v241 = vpop.permute.xlu0 %240
    %242 = vrot.lane.b32.xlu0 %v210, 64
    %v243 = vpop.permute.xlu0 %242
    %244 = vrot.lane.b32.xlu0 %v215, 64
    %v245 = vpop.permute.xlu0 %244
    %v250 = vsel %vm35, %v27, %v223
    %v251 = vsel %vm35, %v28, %v225
    %v252 = vsel %vm35, %v29, %v227
    %v253 = vsel %vm35, %v30, %v229
    %vm254 = vcmask 523264
    %v255 = vsel %vm254, %v250, %v239
    %v256 = vsel %vm254, %v251, %v241
    %v257 = vsel %vm254, %v252, %v243
    %v258 = vsel %vm254, %v253, %v245
    %v259 = vld [vmem:[%s2] sm:$0xff]
    %v260 = vld [vmem:[%s2 + $0x8] sm:$0xff]
    %v261 = vld [vmem:[%s2 + $0x10] sm:$0xff]
    %v262 = vld [vmem:[%s2 + $0x18] sm:$0xff]
    %v263 = vld [vmem:[%s2 + $0x20] sm:$0xff]
    %v264 = vld [vmem:[%s2 + $0x28] sm:$0xff]
    %v265 = vld [vmem:[%s2 + $0x30] sm:$0xff]
    %v266 = vld [vmem:[%s2 + $0x38] sm:$0xff]
    %v267 = vld [vmem:[%s2 + $0x40] sm:$0xff]
    %v268 = vld [vmem:[%s2 + $0x48] sm:$0xff]
    %v269 = vld [vmem:[%s2 + $0x50] sm:$0xff]
    %v270 = vld [vmem:[%s2 + $0x58] sm:$0xff]
    %v271 = vld [vmem:[%s3] sm:$0x1]
    %v273 = vlaneseq
    %v274 = vshrl.u32 %v273, 7
    %v275 = vsub.s32 0, %v274
    %v276 = vrot.slane %v271, %v275
    %vm278 = vcmask 785408
    %v280 = vsel %vm278, %v255, 0
    %v283 = vsel %vm278, %v256, 0
    %v286 = vsel %vm278, %v257, 0
    %v289 = vsel %vm278, %v258, 0
    %291 = vmatprep.subr.mxu0 0.0
    %292 = vmatpush1.msra.mxu0 0.0
    %293 = vmatprep.subr.mxu0 0.0
    %294 = vmatpush1.msra.mxu0 0.0
    %295 = vmatprep.subr.mxu0 0.0
    %296 = vmatpush1.msra.mxu0 0.0
    %297 = vmatprep.subr.mxu0 0.0
    %298 = vmatpush1.msra.mxu0 0.0
    %299 = vmatprep.subr.mxu0 0.0
    %300 = vmatpush1.msra.mxu0 %v270
    %301 = vmatprep.subr.mxu0 0.0
    %302 = vmatpush1.msra.mxu0 %v269
    %303 = vmatprep.subr.mxu0 0.0
    %304 = vmatpush1.msra.mxu0 %v268
    %305 = vmatprep.subr.mxu0 0.0
    %306 = vmatpush1.msra.mxu0 %v267
    %307 = vmatprep.subr.mxu0 0.0
    %308 = vmatpush1.msra.mxu0 %v266
    %309 = vmatprep.subr.mxu0 0.0
    %310 = vmatpush1.msra.mxu0 %v265
    %311 = vmatprep.subr.mxu0 0.0
    %312 = vmatpush1.msra.mxu0 %v264
    %313 = vmatprep.subr.mxu0 0.0
    %314 = vmatpush1.msra.mxu0 %v263
    %315 = vmatprep.subr.mxu0 0.0
    %316 = vmatpush1.msra.mxu0 %v262
    %317 = vmatprep.subr.mxu0 0.0
    %318 = vmatpush1.msra.mxu0 %v261
    %319 = vmatprep.subr.mxu0 0.0
    %320 = vmatpush1.msra.mxu0 %v260
    %321 = vmatprep.subr.mxu0 0.0
    %322 = vmatpush1.msra.mxu0 %v259
    %323 = vmatprep.subr.mxu0 0.0
    %324 = vmatpush2.msra.mxu0 0.0
    %325 = vmatprep.subr.mxu0 0.0
    %326 = vmatpush2.msra.mxu0 0.0
    %327 = vmatprep.subr.mxu0 0.0
    %328 = vmatpush2.msra.mxu0 0.0
    %329 = vmatprep.subr.mxu0 0.0
    %330 = vmatpush2.msra.mxu0 0.0
    %331 = vmatprep.subr.mxu0 0.0
    %332 = vmatpush2.msra.mxu0 0.0
    %333 = vmatprep.subr.mxu0 0.0
    %334 = vmatpush2.msra.mxu0 0.0
    %335 = vmatprep.subr.mxu0 0.0
    %336 = vmatpush2.msra.mxu0 0.0
    %337 = vmatprep.subr.mxu0 0.0
    %338 = vmatpush2.msra.mxu0 0.0
    %339 = vmatprep.subr.mxu0 0.0
    %340 = vmatpush2.msra.mxu0 0.0
    %341 = vmatprep.subr.mxu0 0.0
    %342 = vmatpush2.msra.mxu0 0.0
    %343 = vmatprep.subr.mxu0 0.0
    %344 = vmatpush2.msra.mxu0 0.0
    %345 = vmatprep.subr.mxu0 0.0
    %346 = vmatpush2.msra.mxu0 0.0
    %347 = vmatprep.subr.mxu0 0.0
    %348 = vmatpush2.msra.mxu0 0.0
    %349 = vmatprep.subr.mxu0 0.0
    %350 = vmatpush2.msra.mxu0 0.0
    %351 = vmatprep.subr.mxu0 0.0
    %352 = vmatpush2.msra.mxu0 0.0
    %353 = vmatprep.subr.mxu0 0.0
    %354 = vmatpush2.msra.mxu0 0.0
    %355 = vmatprep.mubr.f32.mxu0 0.0
    %356 = vmatmul.mubr.f32.gmra.mxu0 %v280
    %v357 = vpop.f32.mrf.mxu0
    %v358 = vadd.f32 %v276, %v357
    %v359 = vpop.f32.mrf.mxu0
    %360 = vmatprep.mubr.f32.mxu0 0.0
    %361 = vmatmul.mubr.f32.gmra.mxu0 %v283
    %v362 = vpop.f32.mrf.mxu0
    %v363 = vadd.f32 %v276, %v362
    %v364 = vpop.f32.mrf.mxu0
    %365 = vmatprep.mubr.f32.mxu0 0.0
    %366 = vmatmul.mubr.f32.gmra.mxu0 %v286
    %v367 = vpop.f32.mrf.mxu0
    %v368 = vadd.f32 %v276, %v367
    %v369 = vpop.f32.mrf.mxu0
    %370 = vmatprep.mubr.f32.mxu0 0.0
    %371 = vmatmul.mubr.f32.gmra.mxu0 %v289
    %v372 = vpop.f32.mrf.mxu0
    %v373 = vadd.f32 %v276, %v372
    %v374 = vpop.f32.mrf.mxu0
    %375 = vdwg.mxu0
    %v376 = vmax.f32 %v358, 0.0
    %v377 = vmax.f32 %v363, 0.0
    %v378 = vmax.f32 %v368, 0.0
    %v379 = vmax.f32 %v373, 0.0
    %v380 = vld [vmem:[%s4] sm:$0xff]
    %v381 = vld [vmem:[%s4 + $0x8] sm:$0xff]
    %v382 = vld [vmem:[%s4 + $0x10] sm:$0xff]
    %v383 = vld [vmem:[%s4 + $0x18] sm:$0xff]
    %v384 = vadd.f32 %v376, %v380
    %v385 = vadd.f32 %v377, %v381
    %v386 = vadd.f32 %v378, %v382
    %v387 = vadd.f32 %v379, %v383
    %388 = vmatprep.subr.mxu0 0.0
    %389 = vmatpush1.msra.mxu0 0.0
    %390 = vmatprep.subr.mxu0 0.0
    %391 = vmatpush1.msra.mxu0 0.0
    %392 = vmatprep.subr.mxu0 0.0
    %393 = vmatpush1.msra.mxu0 0.0
    %394 = vmatprep.subr.mxu0 0.0
    %395 = vmatpush1.msra.mxu0 0.0
    %396 = vmatprep.subr.mxu0 0.0
    %397 = vmatpush1.msra.mxu0 0.0
    %398 = vmatprep.subr.mxu0 0.0
    %399 = vmatpush1.msra.mxu0 0.0
    %400 = vmatprep.subr.mxu0 0.0
    %401 = vmatpush1.msra.mxu0 0.0
    %402 = vmatprep.subr.mxu0 0.0
    %403 = vmatpush1.msra.mxu0 0.0
    %404 = vmatprep.subr.mxu0 0.0
    %405 = vmatpush1.msra.mxu0 0.0
    %406 = vmatprep.subr.mxu0 0.0
    %407 = vmatpush1.msra.mxu0 0.0
    %408 = vmatprep.subr.mxu0 0.0
    %409 = vmatpush1.msra.mxu0 0.0
    %410 = vmatprep.subr.mxu0 0.0
    %411 = vmatpush1.msra.mxu0 0.0
    %412 = vmatprep.subr.mxu0 0.0
    %413 = vmatpush1.msra.mxu0 %v387
    %414 = vmatprep.subr.mxu0 0.0
    %415 = vmatpush1.msra.mxu0 %v386
    %416 = vmatprep.subr.mxu0 0.0
    %417 = vmatpush1.msra.mxu0 %v385
    %418 = vmatprep.subr.mxu0 0.0
    %419 = vmatpush1.msra.mxu0 %v384
    %420 = vmatprep.subr.mxu0 0.0
    %421 = vmatpush2.msra.mxu0 0.0
    %422 = vmatprep.subr.mxu0 0.0
    %423 = vmatpush2.msra.mxu0 0.0
    %424 = vmatprep.subr.mxu0 0.0
    %425 = vmatpush2.msra.mxu0 0.0
    %426 = vmatprep.subr.mxu0 0.0
    %427 = vmatpush2.msra.mxu0 0.0
    %428 = vmatprep.subr.mxu0 0.0
    %429 = vmatpush2.msra.mxu0 0.0
    %430 = vmatprep.subr.mxu0 0.0
    %431 = vmatpush2.msra.mxu0 0.0
    %432 = vmatprep.subr.mxu0 0.0
    %433 = vmatpush2.msra.mxu0 0.0
    %434 = vmatprep.subr.mxu0 0.0
    %435 = vmatpush2.msra.mxu0 0.0
    %436 = vmatprep.subr.mxu0 0.0
    %437 = vmatpush2.msra.mxu0 0.0
    %438 = vmatprep.subr.mxu0 0.0
    %439 = vmatpush2.msra.mxu0 0.0
    %440 = vmatprep.subr.mxu0 0.0
    %441 = vmatpush2.msra.mxu0 0.0
    %442 = vmatprep.subr.mxu0 0.0
    %443 = vmatpush2.msra.mxu0 0.0
    %444 = vmatprep.subr.mxu0 0.0
    %445 = vmatpush2.msra.mxu0 0.0
    %446 = vmatprep.subr.mxu0 0.0
    %447 = vmatpush2.msra.mxu0 0.0
    %448 = vmatprep.subr.mxu0 0.0
    %449 = vmatpush2.msra.mxu0 0.0
    %450 = vmatprep.subr.mxu0 0.0
    %451 = vmatpush2.msra.mxu0 0.0
    %452 = vmatprep.mubr.f32.mxu0 0.0
    %453 = vmatmul.mubr.f32.gmra.mxu0 %v37
    %v454 = vpop.f32.mrf.mxu0
    %v455 = vadd.f32 0.0, %v454
    %v456 = vpop.f32.mrf.mxu0
    %457 = vmatprep.mubr.f32.mxu0 0.0
    %458 = vmatmul.mubr.f32.gmra.mxu0 %v40
    %v459 = vpop.f32.mrf.mxu0
    %v460 = vadd.f32 0.0, %v459
    %v461 = vpop.f32.mrf.mxu0
    %462 = vmatprep.mubr.f32.mxu0 0.0
    %463 = vmatmul.mubr.f32.gmra.mxu0 %v43
    %v464 = vpop.f32.mrf.mxu0
    %v465 = vadd.f32 0.0, %v464
    %v466 = vpop.f32.mrf.mxu0
    %467 = vmatprep.mubr.f32.mxu0 0.0
    %468 = vmatmul.mubr.f32.gmra.mxu0 %v46
    %v469 = vpop.f32.mrf.mxu0
    %v470 = vadd.f32 0.0, %v469
    %v471 = vpop.f32.mrf.mxu0
    %472 = vdwg.mxu0
    %473 = vmatprep.subr.mxu0 0.0
    %474 = vmatpush1.msra.mxu0 0.0
    %475 = vmatprep.subr.mxu0 0.0
    %476 = vmatpush1.msra.mxu0 0.0
    %477 = vmatprep.subr.mxu0 0.0
    %478 = vmatpush1.msra.mxu0 0.0
    %479 = vmatprep.subr.mxu0 0.0
    %480 = vmatpush1.msra.mxu0 0.0
    %481 = vmatprep.subr.mxu0 0.0
    %482 = vmatpush1.msra.mxu0 0.0
    %483 = vmatprep.subr.mxu0 0.0
    %484 = vmatpush1.msra.mxu0 0.0
    %485 = vmatprep.subr.mxu0 0.0
    %486 = vmatpush1.msra.mxu0 0.0
    %487 = vmatprep.subr.mxu0 0.0
    %488 = vmatpush1.msra.mxu0 0.0
    %489 = vmatprep.subr.mxu0 0.0
    %490 = vmatpush1.msra.mxu0 0.0
    %491 = vmatprep.subr.mxu0 0.0
    %492 = vmatpush1.msra.mxu0 0.0
    %493 = vmatprep.subr.mxu0 0.0
    %494 = vmatpush1.msra.mxu0 0.0
    %495 = vmatprep.subr.mxu0 0.0
    %496 = vmatpush1.msra.mxu0 0.0
    %497 = vmatprep.subr.mxu0 0.0
    %498 = vmatpush1.msra.mxu0 %v470
    %499 = vmatprep.subr.mxu0 0.0
    %500 = vmatpush1.msra.mxu0 %v465
    %501 = vmatprep.subr.mxu0 0.0
    %502 = vmatpush1.msra.mxu0 %v460
    %503 = vmatprep.subr.mxu0 0.0
    %504 = vmatpush1.msra.mxu0 %v455
    %505 = vmatprep.subr.mxu0 0.0
    %506 = vmatpush2.msra.mxu0 0.0
    %507 = vmatprep.subr.mxu0 0.0
    %508 = vmatpush2.msra.mxu0 0.0
    %509 = vmatprep.subr.mxu0 0.0
    %510 = vmatpush2.msra.mxu0 0.0
    %511 = vmatprep.subr.mxu0 0.0
    %512 = vmatpush2.msra.mxu0 0.0
    %513 = vmatprep.subr.mxu0 0.0
    %514 = vmatpush2.msra.mxu0 0.0
    %515 = vmatprep.subr.mxu0 0.0
    %516 = vmatpush2.msra.mxu0 0.0
    %517 = vmatprep.subr.mxu0 0.0
    %518 = vmatpush2.msra.mxu0 0.0
    %519 = vmatprep.subr.mxu0 0.0
    %520 = vmatpush2.msra.mxu0 0.0
    %521 = vmatprep.subr.mxu0 0.0
    %522 = vmatpush2.msra.mxu0 0.0
    %523 = vmatprep.subr.mxu0 0.0
    %524 = vmatpush2.msra.mxu0 0.0
    %525 = vmatprep.subr.mxu0 0.0
    %526 = vmatpush2.msra.mxu0 0.0
    %527 = vmatprep.subr.mxu0 0.0
    %528 = vmatpush2.msra.mxu0 0.0
    %529 = vmatprep.subr.mxu0 0.0
    %530 = vmatpush2.msra.mxu0 0.0
    %531 = vmatprep.subr.mxu0 0.0
    %532 = vmatpush2.msra.mxu0 0.0
    %533 = vmatprep.subr.mxu0 0.0
    %534 = vmatpush2.msra.mxu0 0.0
    %535 = vmatprep.subr.mxu0 0.0
    %536 = vmatpush2.msra.mxu0 0.0
    %537 = vmatprep.mubr.f32.mxu0 0.0
    %538 = vmatmul.mubr.f32.gmra.mxu0 %v37
    %v539 = vpop.f32.mrf.mxu0
    %v540 = vadd.f32 0.0, %v539
    %v541 = vpop.f32.mrf.mxu0
    %542 = vmatprep.mubr.f32.mxu0 0.0
    %543 = vmatmul.mubr.f32.gmra.mxu0 %v40
    %v544 = vpop.f32.mrf.mxu0
    %v545 = vadd.f32 0.0, %v544
    %v546 = vpop.f32.mrf.mxu0
    %547 = vmatprep.mubr.f32.mxu0 0.0
    %548 = vmatmul.mubr.f32.gmra.mxu0 %v43
    %v549 = vpop.f32.mrf.mxu0
    %v550 = vadd.f32 0.0, %v549
    %v551 = vpop.f32.mrf.mxu0
    %552 = vmatprep.mubr.f32.mxu0 0.0
    %553 = vmatmul.mubr.f32.gmra.mxu0 %v46
    %v554 = vpop.f32.mrf.mxu0
    %v555 = vadd.f32 0.0, %v554
    %v556 = vpop.f32.mrf.mxu0
    %557 = vdwg.mxu0
    %562 = vrot.lane.b32.xlu0 %v455, 64
    %v563 = vpop.permute.xlu0 %562
    %564 = vrot.lane.b32.xlu0 %v460, 64
    %v565 = vpop.permute.xlu0 %564
    %566 = vrot.lane.b32.xlu0 %v465, 64
    %v567 = vpop.permute.xlu0 %566
    %568 = vrot.lane.b32.xlu0 %v470, 64
    %v569 = vpop.permute.xlu0 %568
    %v574 = vsel %vm254, %v384, %v563
    %v575 = vsel %vm254, %v385, %v565
    %v576 = vsel %vm254, %v386, %v567
    %v577 = vsel %vm254, %v387, %v569
    %v578 = vld [vmem:[%s5] sm:$0xff]
    %v579 = vld [vmem:[%s5 + $0x8] sm:$0xff]
    %v580 = vld [vmem:[%s5 + $0x10] sm:$0xff]
    %v581 = vld [vmem:[%s5 + $0x18] sm:$0xff]
    %v582 = vld [vmem:[%s5 + $0x20] sm:$0xff]
    %v583 = vld [vmem:[%s5 + $0x28] sm:$0xff]
    %v584 = vld [vmem:[%s5 + $0x30] sm:$0xff]
    %v585 = vld [vmem:[%s5 + $0x38] sm:$0xff]
    %v586 = vld [vmem:[%s5 + $0x40] sm:$0xff]
    %v587 = vld [vmem:[%s5 + $0x48] sm:$0xff]
    %v588 = vld [vmem:[%s5 + $0x50] sm:$0xff]
    %v589 = vld [vmem:[%s5 + $0x58] sm:$0xff]
    %v590 = vld [vmem:[%s5 + $0x60] sm:$0xff]
    %v591 = vld [vmem:[%s5 + $0x68] sm:$0xff]
    %v592 = vld [vmem:[%s5 + $0x70] sm:$0xff]
    %v593 = vld [vmem:[%s5 + $0x78] sm:$0xff]
    %v594 = vld [vmem:[%s5 + $0x80] sm:$0xff]
    %v595 = vld [vmem:[%s5 + $0x88] sm:$0xff]
    %v596 = vld [vmem:[%s5 + $0x90] sm:$0xff]
    %v597 = vld [vmem:[%s5 + $0x98] sm:$0xff]
    %v598 = vld [vmem:[%s5 + $0xa0] sm:$0xff]
    %v599 = vld [vmem:[%s5 + $0xa8] sm:$0xff]
    %v600 = vld [vmem:[%s5 + $0xb0] sm:$0xff]
    %v601 = vld [vmem:[%s5 + $0xb8] sm:$0xff]
    %v602 = vld [vmem:[%s6] sm:$0x1]
    %v604 = vlaneseq
    %v605 = vshrl.u32 %v604, 7
    %v606 = vsub.s32 0, %v605
    %v607 = vrot.slane %v602, %v606
    %v610 = vsel %vm254, %v540, 0
    %v613 = vsel %vm254, %v545, 0
    %v616 = vsel %vm254, %v550, 0
    %v619 = vsel %vm254, %v555, 0
    %621 = vmatprep.subr.mxu0 0.0
    %622 = vmatpush1.msra.mxu0 %v593
    %623 = vmatprep.subr.mxu0 0.0
    %624 = vmatpush1.msra.mxu0 %v592
    %625 = vmatprep.subr.mxu0 0.0
    %626 = vmatpush1.msra.mxu0 %v591
    %627 = vmatprep.subr.mxu0 0.0
    %628 = vmatpush1.msra.mxu0 %v590
    %629 = vmatprep.subr.mxu0 0.0
    %630 = vmatpush1.msra.mxu0 %v589
    %631 = vmatprep.subr.mxu0 0.0
    %632 = vmatpush1.msra.mxu0 %v588
    %633 = vmatprep.subr.mxu0 0.0
    %634 = vmatpush1.msra.mxu0 %v587
    %635 = vmatprep.subr.mxu0 0.0
    %636 = vmatpush1.msra.mxu0 %v586
    %637 = vmatprep.subr.mxu0 0.0
    %638 = vmatpush1.msra.mxu0 %v585
    %639 = vmatprep.subr.mxu0 0.0
    %640 = vmatpush1.msra.mxu0 %v584
    %641 = vmatprep.subr.mxu0 0.0
    %642 = vmatpush1.msra.mxu0 %v583
    %643 = vmatprep.subr.mxu0 0.0
    %644 = vmatpush1.msra.mxu0 %v582
    %645 = vmatprep.subr.mxu0 0.0
    %646 = vmatpush1.msra.mxu0 %v581
    %647 = vmatprep.subr.mxu0 0.0
    %648 = vmatpush1.msra.mxu0 %v580
    %649 = vmatprep.subr.mxu0 0.0
    %650 = vmatpush1.msra.mxu0 %v579
    %651 = vmatprep.subr.mxu0 0.0
    %652 = vmatpush1.msra.mxu0 %v578
    %653 = vmatprep.subr.mxu0 0.0
    %654 = vmatpush2.msra.mxu0 0.0
    %655 = vmatprep.subr.mxu0 0.0
    %656 = vmatpush2.msra.mxu0 0.0
    %657 = vmatprep.subr.mxu0 0.0
    %658 = vmatpush2.msra.mxu0 0.0
    %659 = vmatprep.subr.mxu0 0.0
    %660 = vmatpush2.msra.mxu0 0.0
    %661 = vmatprep.subr.mxu0 0.0
    %662 = vmatpush2.msra.mxu0 0.0
    %663 = vmatprep.subr.mxu0 0.0
    %664 = vmatpush2.msra.mxu0 0.0
    %665 = vmatprep.subr.mxu0 0.0
    %666 = vmatpush2.msra.mxu0 0.0
    %667 = vmatprep.subr.mxu0 0.0
    %668 = vmatpush2.msra.mxu0 0.0
    %669 = vmatprep.subr.mxu0 0.0
    %670 = vmatpush2.msra.mxu0 %v601
    %671 = vmatprep.subr.mxu0 0.0
    %672 = vmatpush2.msra.mxu0 %v600
    %673 = vmatprep.subr.mxu0 0.0
    %674 = vmatpush2.msra.mxu0 %v599
    %675 = vmatprep.subr.mxu0 0.0
    %676 = vmatpush2.msra.mxu0 %v598
    %677 = vmatprep.subr.mxu0 0.0
    %678 = vmatpush2.msra.mxu0 %v597
    %679 = vmatprep.subr.mxu0 0.0
    %680 = vmatpush2.msra.mxu0 %v596
    %681 = vmatprep.subr.mxu0 0.0
    %682 = vmatpush2.msra.mxu0 %v595
    %683 = vmatprep.subr.mxu0 0.0
    %684 = vmatpush2.msra.mxu0 %v594
    %685 = vmatprep.mubr.f32.mxu0 %v610
    %686 = vmatmul.mubr.f32.gmra.mxu0 %v574
    %v687 = vpop.f32.mrf.mxu0
    %v688 = vadd.f32 %v607, %v687
    %v689 = vpop.f32.mrf.mxu0
    %690 = vmatprep.mubr.f32.mxu0 %v613
    %691 = vmatmul.mubr.f32.gmra.mxu0 %v575
    %v692 = vpop.f32.mrf.mxu0
    %v693 = vadd.f32 %v607, %v692
    %v694 = vpop.f32.mrf.mxu0
    %695 = vmatprep.mubr.f32.mxu0 %v616
    %696 = vmatmul.mubr.f32.gmra.mxu0 %v576
    %v697 = vpop.f32.mrf.mxu0
    %v698 = vadd.f32 %v607, %v697
    %v699 = vpop.f32.mrf.mxu0
    %700 = vmatprep.mubr.f32.mxu0 %v619
    %701 = vmatmul.mubr.f32.gmra.mxu0 %v577
    %v702 = vpop.f32.mrf.mxu0
    %v703 = vadd.f32 %v607, %v702
    %v704 = vpop.f32.mrf.mxu0
    %705 = vdwg.mxu0
    %v706 = vmax.f32 %v688, 0.0
    %v707 = vmax.f32 %v693, 0.0
    %v708 = vmax.f32 %v698, 0.0
    %v709 = vmax.f32 %v703, 0.0
    %v710 = vadd.f32 %v27, %v706
    %v711 = vadd.f32 %v28, %v707
    %v712 = vadd.f32 %v29, %v708
    %v713 = vadd.f32 %v30, %v709
    %714 = vst.msk [vmem:[#allocation2] sm:$0xff] %vm35, %v710
    %715 = vst.msk [vmem:[#allocation2 + $0x8] sm:$0xff] %vm35, %v711
    %716 = vst.msk [vmem:[#allocation2 + $0x10] sm:$0xff] %vm35, %v712
    %717 = vst.msk [vmem:[#allocation2 + $0x18] sm:$0xff] %vm35, %v713
    // Predicated region
    $region30: #{tpu_custom_call.1} parent=1 // pred_check
      _
    $region31: #{tpu_custom_call.1} parent=1 // pred_check_branch
      %719 = sbr.rel (0) target = $region33
    $region32: #{tpu_custom_call.1} parent=1 // pred_region
      %s721 = ssub.s32 512, 512
      %722 = vsyncadd [#allocation3], %s721
      %s723 = sshll.u32 [#allocation2], 4
      %s724 = int_to_ptr.vmem [resolvable:$true] %s723
      %729 = dma.vmem_to_hbm [thread:$0]  %s724, 512, %s7, [#allocation3], 128, 128, 8
    $region33: #{tpu_custom_call.1} parent=1 // pred_fallthru
      _
    // Predicated region
    $region34: #{tpu_custom_call.1} parent=1 // pred_check
      _
    $region35: #{tpu_custom_call.1} parent=1 // pred_check_branch
      %731 = sbr.rel (0) target = $region37
    $region36: #{tpu_custom_call.1} parent=1 // pred_region
      %732 = dma.done [#allocation3], 512
    $region37: #{tpu_custom_call.1} parent=1 // pred_fallthru
      _
    %733 = vsyncpa [#allocation3], 1

</llo_original>
